<compile_context>
chip_gen: v5e
topology: v5e:2x2
jax: 0.10.0
libtpu: 0.0.40
codegen_flags: <defaults>
</compile_context>

<pallas_src>
import math

import jax
import jax.numpy as jnp
from jax.experimental import pallas as pl
from jax.experimental.pallas import tpu as pltpu

HIDDEN = 768    # BERT pooler output width
MID = 128       # linear1 out_features
NCLS = 4        # linear2 out_features (stance classes)
OUT_PAD = 128   # lane-dense padded width for linear2 output


def _head_kernel(x_ref, w1_ref, b1_ref, w2_ref, b2_ref, o_ref):
    """o = relu(x @ W1 + b1) @ W2pad + b2pad   (dropout == identity at eval)."""
    x = x_ref[...]                                    # (TM, 768) bf16
    h = jnp.dot(x, w1_ref[...],
                preferred_element_type=jnp.float32)   # (TM, 128) f32   MXU
    h = jnp.maximum(h + b1_ref[...], 0.0)             # bias + ReLU     VPU (f32)
    o = jnp.dot(h.astype(jnp.bfloat16), w2_ref[...],
                preferred_element_type=jnp.float32)   # (TM, 128) f32   MXU
    o_ref[...] = (o + b2_ref[...]).astype(o_ref.dtype)  # unmasked lane-dense store


def _round_up(x, m):
    return (x + m - 1) // m * m


def stance_head(pooler_output, w1, b1, w2, b2):
    """Classification head.

    pooler_output: (B, 768) f32
    w1: (768, 128), b1: (128,), w2: (128, 4), b2: (4,)   [stored as (in, out)]
    returns logits (B, 4) f32
    """
    B = pooler_output.shape[0]

    # Batch tile: multiple of 16 (bf16 sublane packing); 128 rows = one MXU pass.
    TM = 128 if B >= 128 else _round_up(B, 16)
    B_pad = _round_up(B, TM)

    # bf16 inputs/weights (f32 accumulation inside the kernel).
    x = jnp.zeros((B_pad, HIDDEN), jnp.bfloat16).at[:B].set(
        pooler_output.astype(jnp.bfloat16))
    w1_b = w1.astype(jnp.bfloat16)
    # Lane-dense second linear: zero-pad W2 / b2 to 128 output columns.
    w2_p = jnp.zeros((MID, OUT_PAD), jnp.bfloat16).at[:, :NCLS].set(
        w2.astype(jnp.bfloat16))
    b1_2d = b1.reshape(1, MID).astype(jnp.float32)
    b2_p = jnp.zeros((1, OUT_PAD), jnp.float32).at[:, :NCLS].set(
        b2.astype(jnp.float32))

    grid = (B_pad // TM,)

    logits_pad = pl.pallas_call(
        _head_kernel,
        out_shape=jax.ShapeDtypeStruct((B_pad, OUT_PAD), jnp.float32),
        grid_spec=pltpu.PrefetchScalarGridSpec(
            num_scalar_prefetch=0,
            grid=grid,
            in_specs=[
                pl.BlockSpec((TM, HIDDEN), lambda i: (i, 0)),    # x: tiled over batch
                pl.BlockSpec((HIDDEN, MID), lambda i: (0, 0)),   # W1: VMEM-resident
                pl.BlockSpec((1, MID), lambda i: (0, 0)),        # b1
                pl.BlockSpec((MID, OUT_PAD), lambda i: (0, 0)),  # W2 (padded)
                pl.BlockSpec((1, OUT_PAD), lambda i: (0, 0)),    # b2 (padded)
            ],
            out_specs=pl.BlockSpec((TM, OUT_PAD), lambda i: (i, 0)),
        ),
        compiler_params=pltpu.CompilerParams(
            dimension_semantics=("parallel",),      # v7x: shard batch over 2 TCs
            vmem_limit_bytes=32 * 1024 * 1024,      # bounded for v7x's 64 MiB VMEM
        ),
    )(x, w1_b, b1_2d, w2_p, b2_p)

    return logits_pad[:B, :NCLS]


def init_params(key):
    """Deterministic init matching nn.Linear default (U(-1/sqrt(fan_in), +))."""
    k1, k2, k3, k4 = jax.random.split(key, 4)
    bound1 = 1.0 / math.sqrt(HIDDEN)
    bound2 = 1.0 / math.sqrt(MID)
    # stored as (in, out): transpose of PyTorch's (out, in) weight layout
    w1 = jax.random.uniform(k1, (HIDDEN, MID), jnp.float32, -bound1, bound1)
    b1 = jax.random.uniform(k2, (MID,), jnp.float32, -bound1, bound1)
    w2 = jax.random.uniform(k3, (MID, NCLS), jnp.float32, -bound2, bound2)
    b2 = jax.random.uniform(k4, (NCLS,), jnp.float32, -bound2, bound2)
    return w1, b1, w2, b2


if __name__ == "__main__":
    key = jax.random.PRNGKey(0)
    k_in, k_par = jax.random.split(key)

    B = 8  # small batch
    # synthetic stand-in for self.bert(**x).pooler_output
    pooler_output = jax.random.normal(k_in, (B, HIDDEN), jnp.float32)
    w1, b1, w2, b2 = init_params(k_par)

    logits = stance_head(pooler_output, w1, b1, w2, b2)
    logits = jax.block_until_ready(logits)
    assert logits.shape == (B, NCLS)

    # --- reference checks ---------------------------------------------------
    # (1) bf16-consistent reference (same rounding as the kernel): tight check.
    x_b = pooler_output.astype(jnp.bfloat16).astype(jnp.float32)
    w1_r = w1.astype(jnp.bfloat16).astype(jnp.float32)
    w2_r = w2.astype(jnp.bfloat16).astype(jnp.float32)
    h_r = jnp.maximum(x_b @ w1_r + b1, 0.0)
    h_r = h_r.astype(jnp.bfloat16).astype(jnp.float32)
    ref_bf16 = h_r @ w2_r + b2
    assert jnp.allclose(logits, ref_bf16, atol=1e-3, rtol=1e-3)

    # (2) full-precision f32 reference: loose check (bf16 inputs / f32 accum).
    ref_f32 = jnp.maximum(pooler_output @ w1 + b1, 0.0) @ w2 + b2
    assert jnp.allclose(logits, ref_f32, atol=5e-2)

    # predict() equivalent: argmax over logits
    _pred = jnp.argmax(logits, axis=-1)

    print("KERNEL_OK")
</pallas_src>

<mosaic_0001>
module attributes {stable_mosaic.version = 11 : i64} {
  func.func @_head_kernel(%arg0: i32, %arg1: memref<16x768xbf16, #tpu.memory_space<vmem>>, %arg2: memref<768x128xbf16, #tpu.memory_space<vmem>>, %arg3: memref<1x128xf32, #tpu.memory_space<vmem>>, %arg4: memref<128x128xbf16, #tpu.memory_space<vmem>>, %arg5: memref<1x128xf32, #tpu.memory_space<vmem>>, %arg6: memref<16x128xf32, #tpu.memory_space<vmem>>) attributes {dimension_semantics = [#tpu.dimension_semantics<parallel>], iteration_bounds = array<i64: 1>, scalar_prefetch = 0 : i64, scratch_operands = 0 : i64, tpu.core_type = #tpu.core_type<tc>, window_params = [{transform_indices = @transform_0, window_bounds = array<i64: 16, 768>}, {pipeline_mode = #tpu.pipeline_mode<synchronous>, transform_indices = @transform_1, window_bounds = array<i64: 768, 128>}, {pipeline_mode = #tpu.pipeline_mode<synchronous>, transform_indices = @transform_2, window_bounds = array<i64: 1, 128>}, {pipeline_mode = #tpu.pipeline_mode<synchronous>, transform_indices = @transform_3, window_bounds = array<i64: 128, 128>}, {pipeline_mode = #tpu.pipeline_mode<synchronous>, transform_indices = @transform_4, window_bounds = array<i64: 1, 128>}, {transform_indices = @transform_5, window_bounds = array<i64: 16, 128>}]} {
    %c0 = arith.constant 0 : index
    %c0_0 = arith.constant 0 : index
    %0 = vector.load %arg1[%c0, %c0_0] : memref<16x768xbf16, #tpu.memory_space<vmem>>, vector<16x768xbf16>
    %c0_1 = arith.constant 0 : index
    %c0_2 = arith.constant 0 : index
    %1 = vector.load %arg2[%c0_1, %c0_2] : memref<768x128xbf16, #tpu.memory_space<vmem>>, vector<768x128xbf16>
    %cst = arith.constant dense<0.000000e+00> : vector<16x128xf32>
    %2 = tpu.matmul %0, %1, %cst {dimension_numbers = #tpu.dot_dimension_numbers<[1], [0], [0], [1], [0, 0, 1, 1], [], []>} : vector<16x768xbf16>, vector<768x128xbf16>, vector<16x128xf32> -> vector<16x128xf32>
    %c0_3 = arith.constant 0 : index
    %c0_4 = arith.constant 0 : index
    %3 = vector.load %arg3[%c0_3, %c0_4] : memref<1x128xf32, #tpu.memory_space<vmem>>, vector<1x128xf32>
    %4 = vector.broadcast %3 : vector<1x128xf32> to vector<16x128xf32>
    %5 = arith.addf %2, %4 : vector<16x128xf32>
    %cst_5 = arith.constant 0.000000e+00 : f32
    %6 = vector.broadcast %cst_5 : f32 to vector<16x128xf32>
    %7 = arith.maximumf %5, %6 : vector<16x128xf32>
    %8 = arith.truncf %7 : vector<16x128xf32> to vector<16x128xbf16>
    %c0_6 = arith.constant 0 : index
    %c0_7 = arith.constant 0 : index
    %9 = vector.load %arg4[%c0_6, %c0_7] : memref<128x128xbf16, #tpu.memory_space<vmem>>, vector<128x128xbf16>
    %cst_8 = arith.constant dense<0.000000e+00> : vector<16x128xf32>
    %10 = tpu.matmul %8, %9, %cst_8 {dimension_numbers = #tpu.dot_dimension_numbers<[1], [0], [0], [1], [0, 0, 1, 1], [], []>} : vector<16x128xbf16>, vector<128x128xbf16>, vector<16x128xf32> -> vector<16x128xf32>
    %c0_9 = arith.constant 0 : index
    %c0_10 = arith.constant 0 : index
    %11 = vector.load %arg5[%c0_9, %c0_10] : memref<1x128xf32, #tpu.memory_space<vmem>>, vector<1x128xf32>
    %12 = vector.broadcast %11 : vector<1x128xf32> to vector<16x128xf32>
    %13 = arith.addf %10, %12 : vector<16x128xf32>
    %c0_11 = arith.constant 0 : index
    %c0_12 = arith.constant 0 : index
    %14 = vector.load %arg6[%c0_11, %c0_12] : memref<16x128xf32, #tpu.memory_space<vmem>>, vector<16x128xf32>
    tpu.vector_store %arg6[%c0_11, %c0_12], %13 {strides = array<i32>} : memref<16x128xf32, #tpu.memory_space<vmem>>, vector<16x128xf32>,
    return
  }
  func.func @transform_0(%arg0: i32) -> (i32, i32) {
    %c0_i32 = arith.constant 0 : i32
    %c0_i32_0 = arith.constant 0 : i32
    return %arg0, %c0_i32 : i32, i32
  }
  func.func @transform_1(%arg0: i32) -> (i32, i32) {
    %c0_i32 = arith.constant 0 : i32
    %c0_i32_0 = arith.constant 0 : i32
    %c0_i32_1 = arith.constant 0 : i32
    return %c0_i32, %c0_i32_0 : i32, i32
  }
  func.func @transform_2(%arg0: i32) -> (i32, i32) {
    %c0_i32 = arith.constant 0 : i32
    %c0_i32_0 = arith.constant 0 : i32
    %c0_i32_1 = arith.constant 0 : i32
    return %c0_i32, %c0_i32_0 : i32, i32
  }
  func.func @transform_3(%arg0: i32) -> (i32, i32) {
    %c0_i32 = arith.constant 0 : i32
    %c0_i32_0 = arith.constant 0 : i32
    %c0_i32_1 = arith.constant 0 : i32
    return %c0_i32, %c0_i32_0 : i32, i32
  }
  func.func @transform_4(%arg0: i32) -> (i32, i32) {
    %c0_i32 = arith.constant 0 : i32
    %c0_i32_0 = arith.constant 0 : i32
    %c0_i32_1 = arith.constant 0 : i32
    return %c0_i32, %c0_i32_0 : i32, i32
  }
  func.func @transform_5(%arg0: i32) -> (i32, i32) {
    %c0_i32 = arith.constant 0 : i32
    %c0_i32_0 = arith.constant 0 : i32
    return %arg0, %c0_i32 : i32, i32
  }
}

</mosaic_0001>

<llo_original>
// kernel: tpu_custom_call.1
$region0: #{tpu_custom_call.1}
  #allocation0 [shape = 'u32[]', space=smem, size = 0x4, offset = 0x4, fixed_abs, tag = 'smem constant byte address 0x4 - core index']
  #allocation1 [shape = 'u32[72,128]{1,0:T(1,128)}', space=vmem, size = 0x9000, scoped, tag = 'internal scratch']
  %s0 = inlined_call_operand.hbm [shape: bf16[16,768], index: 0, kind: input, shape index: {}]
  %s1 = inlined_call_operand.hbm [shape: bf16[768,128], index: 1, kind: input, shape index: {}]
  %s2 = inlined_call_operand.vmem [shape: f32[1,128], index: 2, kind: input, shape index: {}]
  %s3 = inlined_call_operand.hbm [shape: bf16[128,128], index: 3, kind: input, shape index: {}]
  %s4 = inlined_call_operand.vmem [shape: f32[1,128], index: 4, kind: input, shape index: {}]
  %s5 = inlined_call_operand.hbm [shape: f32[16,128], index: 5, kind: output, shape index: {}]
  %s6 = sld [smem:[#allocation0]]
  $region42: #{tpu_custom_call.1} parent=0
    _
  %s8 = ssub.s32 1, %s6
  %s9 = scalar_select 0, %s8, %s6
  $region1: #{tpu_custom_call.1} parent=0
    #allocation2 [shape = 'u8[24576]{0}', space=vmem, size = 0x6000, scoped, tag = 'input window, operand 0, single buffered']
    #allocation3 [shape = 's32[1]{0}', space=sflag, size = 0x4, scoped, tag = 'scoped memory for tpu_custom_call.1']
    #allocation4 [shape = 's32[1]{0}', space=sflag, size = 0x4, scoped, tag = 'scoped memory for tpu_custom_call.1']
    #allocation5 [shape = 'u8[196608]{0}', space=vmem, size = 0x30000, scoped, tag = 'input window, operand 1, single buffered']
    #allocation6 [shape = 's32[1]{0}', space=sflag, size = 0x4, scoped, tag = 'scoped memory for tpu_custom_call.1']
    #allocation7 [shape = 'u8[32768]{0}', space=vmem, size = 0x8000, scoped, tag = 'input window, operand 3, single buffered']
    #allocation8 [shape = 'u8[8192]{0}', space=vmem, size = 0x2000, scoped, tag = 'output window, operand 0, single buffered']
    %10 = vsyncpa [#allocation3], 0
    %11 = vsyncpa [#allocation6], 0
    %12 = vsyncpa [#allocation4], 0
    // Predicated region
    $region2: #{tpu_custom_call.1} parent=1 // pred_check
      _
    $region3: #{tpu_custom_call.1} parent=1 // pred_check_branch
      %14 = sbr.rel (0) target = $region5
    $region4: #{tpu_custom_call.1} parent=1 // pred_region
      %16 = vsyncadd [#allocation3], 0
      %s17 = sshll.u32 %s0, 4
      %s18 = int_to_ptr.hbm [resolvable:$true] %s17
      %s19 = sshll.u32 [#allocation2], 4
      %s20 = int_to_ptr.vmem [resolvable:$true] %s19
      %25 = dma.hbm_to_vmem [thread:$0]  %s18, 768, %s20, [#allocation3], 384, 384, 24
    $region5: #{tpu_custom_call.1} parent=1 // pred_fallthru
      _
    // Predicated region
    $region6: #{tpu_custom_call.1} parent=1 // pred_check
      _
    $region7: #{tpu_custom_call.1} parent=1 // pred_check_branch
      %27 = sbr.rel (0) target = $region9
    $region8: #{tpu_custom_call.1} parent=1 // pred_region
      %29 = vsyncadd [#allocation6], 0
      %s30 = sshll.u32 %s1, 4
      %s31 = int_to_ptr.hbm [resolvable:$true] %s30
      %s32 = sshll.u32 [#allocation5], 4
      %s33 = int_to_ptr.vmem [resolvable:$true] %s32
      %38 = dma.hbm_to_vmem [thread:$0]  %s31, 6144, %s33, [#allocation6], 64, 64, 4
    $region9: #{tpu_custom_call.1} parent=1 // pred_fallthru
      _
    // Predicated region
    $region10: #{tpu_custom_call.1} parent=1 // pred_check
      _
    $region11: #{tpu_custom_call.1} parent=1 // pred_check_branch
      %40 = sbr.rel (0) target = $region13
    $region12: #{tpu_custom_call.1} parent=1 // pred_region
      _
    $region13: #{tpu_custom_call.1} parent=1 // pred_fallthru
      _
    // Predicated region
    $region14: #{tpu_custom_call.1} parent=1 // pred_check
      _
    $region15: #{tpu_custom_call.1} parent=1 // pred_check_branch
      %42 = sbr.rel (0) target = $region17
    $region16: #{tpu_custom_call.1} parent=1 // pred_region
      %44 = vsyncadd [#allocation6], 0
      %s45 = sshll.u32 %s3, 4
      %s46 = int_to_ptr.hbm [resolvable:$true] %s45
      %s47 = sshll.u32 [#allocation7], 4
      %s48 = int_to_ptr.vmem [resolvable:$true] %s47
      %53 = dma.hbm_to_vmem [thread:$0]  %s46, 1024, %s48, [#allocation6], 64, 64, 4
    $region17: #{tpu_custom_call.1} parent=1 // pred_fallthru
      _
    // Predicated region
    $region18: #{tpu_custom_call.1} parent=1 // pred_check
      _
    $region19: #{tpu_custom_call.1} parent=1 // pred_check_branch
      %55 = sbr.rel (0) target = $region21
    $region20: #{tpu_custom_call.1} parent=1 // pred_region
      _
    $region21: #{tpu_custom_call.1} parent=1 // pred_fallthru
      _
    // Predicated region
    $region22: #{tpu_custom_call.1} parent=1 // pred_check
      _
    $region23: #{tpu_custom_call.1} parent=1 // pred_check_branch
      %57 = sbr.rel (0) target = $region25
    $region24: #{tpu_custom_call.1} parent=1 // pred_region
      %59 = dma.done [#allocation3], 768
    $region25: #{tpu_custom_call.1} parent=1 // pred_fallthru
      _
    // Predicated region
    $region26: #{tpu_custom_call.1} parent=1 // pred_check
      _
    $region27: #{tpu_custom_call.1} parent=1 // pred_check_branch
      %61 = sbr.rel (0) target = $region29
    $region28: #{tpu_custom_call.1} parent=1 // pred_region
      %63 = dma.done [#allocation6], 6144
    $region29: #{tpu_custom_call.1} parent=1 // pred_fallthru
      _
    // Predicated region
    $region30: #{tpu_custom_call.1} parent=1 // pred_check
      _
    $region31: #{tpu_custom_call.1} parent=1 // pred_check_branch
      %65 = sbr.rel (0) target = $region33
    $region32: #{tpu_custom_call.1} parent=1 // pred_region
      %67 = dma.done [#allocation6], 1024
    $region33: #{tpu_custom_call.1} parent=1 // pred_fallthru
      _
    %v68 = vld [vmem:[#allocation2] sm:$0xff]
    %v69 = vld [vmem:[#allocation2 + $0x8] sm:$0xff]
    %v70 = vld [vmem:[#allocation2 + $0x10] sm:$0xff]
    %v71 = vld [vmem:[#allocation2 + $0x18] sm:$0xff]
    %v72 = vld [vmem:[#allocation2 + $0x20] sm:$0xff]
    %v73 = vld [vmem:[#allocation2 + $0x28] sm:$0xff]
    %v74 = vld [vmem:[#allocation5] sm:$0xf]
    %v75 = vld [vmem:[#allocation5 + $0x4] sm:$0xf]
    %v76 = vld [vmem:[#allocation5 + $0x8] sm:$0xf]
    %v77 = vld [vmem:[#allocation5 + $0xc] sm:$0xf]
    %v78 = vld [vmem:[#allocation5 + $0x10] sm:$0xf]
    %v79 = vld [vmem:[#allocation5 + $0x14] sm:$0xf]
    %v80 = vld [vmem:[#allocation5 + $0x18] sm:$0xf]
    %v81 = vld [vmem:[#allocation5 + $0x1c] sm:$0xf]
    %v82 = vld [vmem:[#allocation5 + $0x20] sm:$0xf]
    %v83 = vld [vmem:[#allocation5 + $0x24] sm:$0xf]
    %v84 = vld [vmem:[#allocation5 + $0x28] sm:$0xf]
    %v85 = vld [vmem:[#allocation5 + $0x2c] sm:$0xf]
    %v86 = vld [vmem:[#allocation5 + $0x30] sm:$0xf]
    %v87 = vld [vmem:[#allocation5 + $0x34] sm:$0xf]
    %v88 = vld [vmem:[#allocation5 + $0x38] sm:$0xf]
    %v89 = vld [vmem:[#allocation5 + $0x3c] sm:$0xf]
    %v90 = vld [vmem:[#allocation5 + $0x40] sm:$0xf]
    %v91 = vld [vmem:[#allocation5 + $0x44] sm:$0xf]
    %v92 = vld [vmem:[#allocation5 + $0x48] sm:$0xf]
    %v93 = vld [vmem:[#allocation5 + $0x4c] sm:$0xf]
    %v94 = vld [vmem:[#allocation5 + $0x50] sm:$0xf]
    %v95 = vld [vmem:[#allocation5 + $0x54] sm:$0xf]
    %v96 = vld [vmem:[#allocation5 + $0x58] sm:$0xf]
    %v97 = vld [vmem:[#allocation5 + $0x5c] sm:$0xf]
    %v98 = vld [vmem:[#allocation5 + $0x60] sm:$0xf]
    %v99 = vld [vmem:[#allocation5 + $0x64] sm:$0xf]
    %v100 = vld [vmem:[#allocation5 + $0x68] sm:$0xf]
    %v101 = vld [vmem:[#allocation5 + $0x6c] sm:$0xf]
    %v102 = vld [vmem:[#allocation5 + $0x70] sm:$0xf]
    %v103 = vld [vmem:[#allocation5 + $0x74] sm:$0xf]
    %v104 = vld [vmem:[#allocation5 + $0x78] sm:$0xf]
    %v105 = vld [vmem:[#allocation5 + $0x7c] sm:$0xf]
    %v106 = vld [vmem:[#allocation5 + $0x80] sm:$0xf]
    %v107 = vld [vmem:[#allocation5 + $0x84] sm:$0xf]
    %v108 = vld [vmem:[#allocation5 + $0x88] sm:$0xf]
    %v109 = vld [vmem:[#allocation5 + $0x8c] sm:$0xf]
    %v110 = vld [vmem:[#allocation5 + $0x90] sm:$0xf]
    %v111 = vld [vmem:[#allocation5 + $0x94] sm:$0xf]
    %v112 = vld [vmem:[#allocation5 + $0x98] sm:$0xf]
    %v113 = vld [vmem:[#allocation5 + $0x9c] sm:$0xf]
    %v114 = vld [vmem:[#allocation5 + $0xa0] sm:$0xf]
    %v115 = vld [vmem:[#allocation5 + $0xa4] sm:$0xf]
    %v116 = vld [vmem:[#allocation5 + $0xa8] sm:$0xf]
    %v117 = vld [vmem:[#allocation5 + $0xac] sm:$0xf]
    %v118 = vld [vmem:[#allocation5 + $0xb0] sm:$0xf]
    %v119 = vld [vmem:[#allocation5 + $0xb4] sm:$0xf]
    %v120 = vld [vmem:[#allocation5 + $0xb8] sm:$0xf]
    %v121 = vld [vmem:[#allocation5 + $0xbc] sm:$0xf]
    %v122 = vld [vmem:[#allocation5 + $0xc0] sm:$0xf]
    %v123 = vld [vmem:[#allocation5 + $0xc4] sm:$0xf]
    %v124 = vld [vmem:[#allocation5 + $0xc8] sm:$0xf]
    %v125 = vld [vmem:[#allocation5 + $0xcc] sm:$0xf]
    %v126 = vld [vmem:[#allocation5 + $0xd0] sm:$0xf]
    %v127 = vld [vmem:[#allocation5 + $0xd4] sm:$0xf]
    %v128 = vld [vmem:[#allocation5 + $0xd8] sm:$0xf]
    %v129 = vld [vmem:[#allocation5 + $0xdc] sm:$0xf]
    %v130 = vld [vmem:[#allocation5 + $0xe0] sm:$0xf]
    %v131 = vld [vmem:[#allocation5 + $0xe4] sm:$0xf]
    %v132 = vld [vmem:[#allocation5 + $0xe8] sm:$0xf]
    %v133 = vld [vmem:[#allocation5 + $0xec] sm:$0xf]
    %v134 = vld [vmem:[#allocation5 + $0xf0] sm:$0xf]
    %v135 = vld [vmem:[#allocation5 + $0xf4] sm:$0xf]
    %v136 = vld [vmem:[#allocation5 + $0xf8] sm:$0xf]
    %v137 = vld [vmem:[#allocation5 + $0xfc] sm:$0xf]
    %v138 = vld [vmem:[#allocation5 + $0x100] sm:$0xf]
    %v139 = vld [vmem:[#allocation5 + $0x104] sm:$0xf]
    %v140 = vld [vmem:[#allocation5 + $0x108] sm:$0xf]
    %v141 = vld [vmem:[#allocation5 + $0x10c] sm:$0xf]
    %v142 = vld [vmem:[#allocation5 + $0x110] sm:$0xf]
    %v143 = vld [vmem:[#allocation5 + $0x114] sm:$0xf]
    %v144 = vld [vmem:[#allocation5 + $0x118] sm:$0xf]
    %v145 = vld [vmem:[#allocation5 + $0x11c] sm:$0xf]
    %v146 = vld [vmem:[#allocation5 + $0x120] sm:$0xf]
    %v147 = vld [vmem:[#allocation5 + $0x124] sm:$0xf]
    %v148 = vld [vmem:[#allocation5 + $0x128] sm:$0xf]
    %v149 = vld [vmem:[#allocation5 + $0x12c] sm:$0xf]
    %v150 = vld [vmem:[#allocation5 + $0x130] sm:$0xf]
    %v151 = vld [vmem:[#allocation5 + $0x134] sm:$0xf]
    %v152 = vld [vmem:[#allocation5 + $0x138] sm:$0xf]
    %v153 = vld [vmem:[#allocation5 + $0x13c] sm:$0xf]
    %v154 = vld [vmem:[#allocation5 + $0x140] sm:$0xf]
    %v155 = vld [vmem:[#allocation5 + $0x144] sm:$0xf]
    %v156 = vld [vmem:[#allocation5 + $0x148] sm:$0xf]
    %v157 = vld [vmem:[#allocation5 + $0x14c] sm:$0xf]
    %v158 = vld [vmem:[#allocation5 + $0x150] sm:$0xf]
    %v159 = vld [vmem:[#allocation5 + $0x154] sm:$0xf]
    %v160 = vld [vmem:[#allocation5 + $0x158] sm:$0xf]
    %v161 = vld [vmem:[#allocation5 + $0x15c] sm:$0xf]
    %v162 = vld [vmem:[#allocation5 + $0x160] sm:$0xf]
    %v163 = vld [vmem:[#allocation5 + $0x164] sm:$0xf]
    %v164 = vld [vmem:[#allocation5 + $0x168] sm:$0xf]
    %v165 = vld [vmem:[#allocation5 + $0x16c] sm:$0xf]
    %v166 = vld [vmem:[#allocation5 + $0x170] sm:$0xf]
    %v167 = vld [vmem:[#allocation5 + $0x174] sm:$0xf]
    %v168 = vld [vmem:[#allocation5 + $0x178] sm:$0xf]
    %v169 = vld [vmem:[#allocation5 + $0x17c] sm:$0xf]
    %v170 = vld [vmem:[%s2] sm:$0x1]
    %v172 = vperm.slane %v170, 0
    %v180 = vunpack.c.l.b16 %v68
    %v181 = vunpack.c.h.b16 %v68
    %v182 = vunpack.c.l.b16 %v69
    %v183 = vunpack.c.h.b16 %v69
    %v184 = vunpack.c.l.b16 %v70
    %v185 = vunpack.c.h.b16 %v70
    %v186 = vunpack.c.l.b16 %v71
    %v187 = vunpack.c.h.b16 %v71
    %v188 = vunpack.c.l.b16 %v72
    %v189 = vunpack.c.h.b16 %v72
    %v190 = vunpack.c.l.b16 %v73
    %v191 = vunpack.c.h.b16 %v73
    %v192 = vpack.c.b16 %v186, %v180
    %v193 = vpack.c.b16 %v187, %v181
    %v194 = vpack.c.b16 %v188, %v182
    %v195 = vpack.c.b16 %v189, %v183
    %v196 = vpack.c.b16 %v190, %v184
    %v197 = vpack.c.b16 %v191, %v185
    %v300 = vunpack.c.l.b16 %v74
    %v301 = vunpack.c.l.b16 %v75
    %v302 = vunpack.c.l.b16 %v76
    %v303 = vunpack.c.l.b16 %v77
    %v304 = vunpack.c.l.b16 %v78
    %v305 = vunpack.c.l.b16 %v79
    %v306 = vunpack.c.l.b16 %v80
    %v307 = vunpack.c.l.b16 %v81
    %v308 = vunpack.c.l.b16 %v82
    %v309 = vunpack.c.l.b16 %v83
    %v310 = vunpack.c.l.b16 %v84
    %v311 = vunpack.c.l.b16 %v85
    %v312 = vunpack.c.l.b16 %v86
    %v313 = vunpack.c.l.b16 %v87
    %v314 = vunpack.c.l.b16 %v88
    %v315 = vunpack.c.l.b16 %v89
    %v316 = vunpack.c.l.b16 %v90
    %v317 = vunpack.c.l.b16 %v91
    %v318 = vunpack.c.l.b16 %v92
    %v319 = vunpack.c.l.b16 %v93
    %v320 = vunpack.c.l.b16 %v94
    %v321 = vunpack.c.l.b16 %v95
    %v322 = vunpack.c.l.b16 %v96
    %v323 = vunpack.c.l.b16 %v97
    %v324 = vunpack.c.l.b16 %v98
    %v325 = vunpack.c.l.b16 %v99
    %v326 = vunpack.c.l.b16 %v100
    %v327 = vunpack.c.l.b16 %v101
    %v328 = vunpack.c.l.b16 %v102
    %v329 = vunpack.c.l.b16 %v103
    %v330 = vunpack.c.l.b16 %v104
    %v331 = vunpack.c.l.b16 %v105
    %v332 = vunpack.c.l.b16 %v106
    %v333 = vunpack.c.l.b16 %v107
    %v334 = vunpack.c.l.b16 %v108
    %v335 = vunpack.c.l.b16 %v109
    %v336 = vunpack.c.l.b16 %v110
    %v337 = vunpack.c.l.b16 %v111
    %v338 = vunpack.c.l.b16 %v112
    %v339 = vunpack.c.l.b16 %v113
    %v340 = vunpack.c.l.b16 %v114
    %v341 = vunpack.c.l.b16 %v115
    %v342 = vunpack.c.l.b16 %v116
    %v343 = vunpack.c.l.b16 %v117
    %v344 = vunpack.c.l.b16 %v118
    %v345 = vunpack.c.l.b16 %v119
    %v346 = vunpack.c.l.b16 %v120
    %v347 = vunpack.c.l.b16 %v121
    %v348 = vunpack.c.l.b16 %v122
    %v349 = vunpack.c.l.b16 %v123
    %v350 = vunpack.c.l.b16 %v124
    %v351 = vunpack.c.l.b16 %v125
    %v352 = vunpack.c.l.b16 %v126
    %v353 = vunpack.c.l.b16 %v127
    %v354 = vunpack.c.l.b16 %v128
    %v355 = vunpack.c.l.b16 %v129
    %v356 = vunpack.c.l.b16 %v130
    %v357 = vunpack.c.l.b16 %v131
    %v358 = vunpack.c.l.b16 %v132
    %v359 = vunpack.c.l.b16 %v133
    %v360 = vunpack.c.l.b16 %v134
    %v361 = vunpack.c.l.b16 %v135
    %v362 = vunpack.c.l.b16 %v136
    %v363 = vunpack.c.l.b16 %v137
    %v364 = vunpack.c.l.b16 %v138
    %v365 = vunpack.c.l.b16 %v139
    %v366 = vunpack.c.l.b16 %v140
    %v367 = vunpack.c.l.b16 %v141
    %v368 = vunpack.c.l.b16 %v142
    %v369 = vunpack.c.l.b16 %v143
    %v370 = vunpack.c.l.b16 %v144
    %v371 = vunpack.c.l.b16 %v145
    %v372 = vunpack.c.l.b16 %v146
    %v373 = vunpack.c.l.b16 %v147
    %v374 = vunpack.c.l.b16 %v148
    %v375 = vunpack.c.l.b16 %v149
    %v376 = vunpack.c.l.b16 %v150
    %v377 = vunpack.c.l.b16 %v151
    %v378 = vunpack.c.l.b16 %v152
    %v379 = vunpack.c.l.b16 %v153
    %v380 = vunpack.c.l.b16 %v154
    %v381 = vunpack.c.l.b16 %v155
    %v382 = vunpack.c.l.b16 %v156
    %v383 = vunpack.c.l.b16 %v157
    %v384 = vunpack.c.l.b16 %v158
    %v385 = vunpack.c.l.b16 %v159
    %v386 = vunpack.c.l.b16 %v160
    %v387 = vunpack.c.l.b16 %v161
    %v388 = vunpack.c.l.b16 %v162
    %v389 = vunpack.c.l.b16 %v163
    %v390 = vunpack.c.l.b16 %v164
    %v391 = vunpack.c.l.b16 %v165
    %v392 = vunpack.c.l.b16 %v166
    %v393 = vunpack.c.l.b16 %v167
    %v394 = vunpack.c.l.b16 %v168
    %v395 = vunpack.c.l.b16 %v169
    %v396 = vpack.c.b16 %v301, %v300
    %v397 = vpack.c.b16 %v303, %v302
    %v398 = vpack.c.b16 %v305, %v304
    %v399 = vpack.c.b16 %v307, %v306
    %v400 = vpack.c.b16 %v309, %v308
    %v401 = vpack.c.b16 %v311, %v310
    %v402 = vpack.c.b16 %v313, %v312
    %v403 = vpack.c.b16 %v315, %v314
    %v404 = vpack.c.b16 %v317, %v316
    %v405 = vpack.c.b16 %v319, %v318
    %v406 = vpack.c.b16 %v321, %v320
    %v407 = vpack.c.b16 %v323, %v322
    %v408 = vpack.c.b16 %v325, %v324
    %v409 = vpack.c.b16 %v327, %v326
    %v410 = vpack.c.b16 %v329, %v328
    %v411 = vpack.c.b16 %v331, %v330
    %v412 = vpack.c.b16 %v333, %v332
    %v413 = vpack.c.b16 %v335, %v334
    %v414 = vpack.c.b16 %v337, %v336
    %v415 = vpack.c.b16 %v339, %v338
    %v416 = vpack.c.b16 %v341, %v340
    %v417 = vpack.c.b16 %v343, %v342
    %v418 = vpack.c.b16 %v345, %v344
    %v419 = vpack.c.b16 %v347, %v346
    %v420 = vpack.c.b16 %v349, %v348
    %v421 = vpack.c.b16 %v351, %v350
    %v422 = vpack.c.b16 %v353, %v352
    %v423 = vpack.c.b16 %v355, %v354
    %v424 = vpack.c.b16 %v357, %v356
    %v425 = vpack.c.b16 %v359, %v358
    %v426 = vpack.c.b16 %v361, %v360
    %v427 = vpack.c.b16 %v363, %v362
    %v428 = vpack.c.b16 %v365, %v364
    %v429 = vpack.c.b16 %v367, %v366
    %v430 = vpack.c.b16 %v369, %v368
    %v431 = vpack.c.b16 %v371, %v370
    %v432 = vpack.c.b16 %v373, %v372
    %v433 = vpack.c.b16 %v375, %v374
    %v434 = vpack.c.b16 %v377, %v376
    %v435 = vpack.c.b16 %v379, %v378
    %v436 = vpack.c.b16 %v381, %v380
    %v437 = vpack.c.b16 %v383, %v382
    %v438 = vpack.c.b16 %v385, %v384
    %v439 = vpack.c.b16 %v387, %v386
    %v440 = vpack.c.b16 %v389, %v388
    %v441 = vpack.c.b16 %v391, %v390
    %v442 = vpack.c.b16 %v393, %v392
    %v443 = vpack.c.b16 %v395, %v394
    %492 = vmatpush.bf16.msra.mxu0 %v403
    %493 = vmatpush.bf16.msra.mxu0 %v402
    %494 = vmatpush.bf16.msra.mxu0 %v401
    %495 = vmatpush.bf16.msra.mxu0 %v400
    %496 = vmatpush.bf16.msra.mxu0 %v399
    %497 = vmatpush.bf16.msra.mxu0 %v398
    %498 = vmatpush.bf16.msra.mxu0 %v397
    %499 = vmatpush.bf16.msra.mxu0 %v396
    %500 = vmatmul.bf16.gmra.mxu0 %v192
    %v501 = vpop.f32.mrf.mxu0
    %v502 = vadd.f32 %v172, %v501
    %v503 = vpop.f32.mrf.mxu0
    %v504 = vadd.f32 %v172, %v503
    %505 = vdwg.mxu0
    %506 = vmatpush.bf16.msra.mxu0 %v411
    %507 = vmatpush.bf16.msra.mxu0 %v410
    %508 = vmatpush.bf16.msra.mxu0 %v409
    %509 = vmatpush.bf16.msra.mxu0 %v408
    %510 = vmatpush.bf16.msra.mxu0 %v407
    %511 = vmatpush.bf16.msra.mxu0 %v406
    %512 = vmatpush.bf16.msra.mxu0 %v405
    %513 = vmatpush.bf16.msra.mxu0 %v404
    %514 = vmatmul.bf16.gmra.mxu0 %v193
    %v515 = vpop.f32.mrf.mxu0
    %v516 = vadd.f32 %v502, %v515
    %v517 = vpop.f32.mrf.mxu0
    %v518 = vadd.f32 %v504, %v517
    %519 = vdwg.mxu0
    %520 = vmatpush.bf16.msra.mxu0 %v419
    %521 = vmatpush.bf16.msra.mxu0 %v418
    %522 = vmatpush.bf16.msra.mxu0 %v417
    %523 = vmatpush.bf16.msra.mxu0 %v416
    %524 = vmatpush.bf16.msra.mxu0 %v415
    %525 = vmatpush.bf16.msra.mxu0 %v414
    %526 = vmatpush.bf16.msra.mxu0 %v413
    %527 = vmatpush.bf16.msra.mxu0 %v412
    %528 = vmatmul.bf16.gmra.mxu0 %v194
    %v529 = vpop.f32.mrf.mxu0
    %v530 = vadd.f32 %v516, %v529
    %v531 = vpop.f32.mrf.mxu0
    %v532 = vadd.f32 %v518, %v531
    %533 = vdwg.mxu0
    %534 = vmatpush.bf16.msra.mxu0 %v427
    %535 = vmatpush.bf16.msra.mxu0 %v426
    %536 = vmatpush.bf16.msra.mxu0 %v425
    %537 = vmatpush.bf16.msra.mxu0 %v424
    %538 = vmatpush.bf16.msra.mxu0 %v423
    %539 = vmatpush.bf16.msra.mxu0 %v422
    %540 = vmatpush.bf16.msra.mxu0 %v421
    %541 = vmatpush.bf16.msra.mxu0 %v420
    %542 = vmatmul.bf16.gmra.mxu0 %v195
    %v543 = vpop.f32.mrf.mxu0
    %v544 = vadd.f32 %v530, %v543
    %v545 = vpop.f32.mrf.mxu0
    %v546 = vadd.f32 %v532, %v545
    %547 = vdwg.mxu0
    %548 = vmatpush.bf16.msra.mxu0 %v435
    %549 = vmatpush.bf16.msra.mxu0 %v434
    %550 = vmatpush.bf16.msra.mxu0 %v433
    %551 = vmatpush.bf16.msra.mxu0 %v432
    %552 = vmatpush.bf16.msra.mxu0 %v431
    %553 = vmatpush.bf16.msra.mxu0 %v430
    %554 = vmatpush.bf16.msra.mxu0 %v429
    %555 = vmatpush.bf16.msra.mxu0 %v428
    %556 = vmatmul.bf16.gmra.mxu0 %v196
    %v557 = vpop.f32.mrf.mxu0
    %v558 = vadd.f32 %v544, %v557
    %v559 = vpop.f32.mrf.mxu0
    %v560 = vadd.f32 %v546, %v559
    %561 = vdwg.mxu0
    %562 = vmatpush.bf16.msra.mxu0 %v443
    %563 = vmatpush.bf16.msra.mxu0 %v442
    %564 = vmatpush.bf16.msra.mxu0 %v441
    %565 = vmatpush.bf16.msra.mxu0 %v440
    %566 = vmatpush.bf16.msra.mxu0 %v439
    %567 = vmatpush.bf16.msra.mxu0 %v438
    %568 = vmatpush.bf16.msra.mxu0 %v437
    %569 = vmatpush.bf16.msra.mxu0 %v436
    %570 = vmatmul.bf16.gmra.mxu0 %v197
    %v571 = vpop.f32.mrf.mxu0
    %v572 = vadd.f32 %v558, %v571
    %v573 = vpop.f32.mrf.mxu0
    %v574 = vadd.f32 %v560, %v573
    %575 = vdwg.mxu0
    %v576 = vmax.f32 %v572, 0.0
    %v577 = vmax.f32 %v574, 0.0
    %v578 = vpack.c.bf16 %v577, %v576
    %v579 = vld [vmem:[#allocation7] sm:$0xf]
    %v580 = vld [vmem:[#allocation7 + $0x4] sm:$0xf]
    %v581 = vld [vmem:[#allocation7 + $0x8] sm:$0xf]
    %v582 = vld [vmem:[#allocation7 + $0xc] sm:$0xf]
    %v583 = vld [vmem:[#allocation7 + $0x10] sm:$0xf]
    %v584 = vld [vmem:[#allocation7 + $0x14] sm:$0xf]
    %v585 = vld [vmem:[#allocation7 + $0x18] sm:$0xf]
    %v586 = vld [vmem:[#allocation7 + $0x1c] sm:$0xf]
    %v587 = vld [vmem:[#allocation7 + $0x20] sm:$0xf]
    %v588 = vld [vmem:[#allocation7 + $0x24] sm:$0xf]
    %v589 = vld [vmem:[#allocation7 + $0x28] sm:$0xf]
    %v590 = vld [vmem:[#allocation7 + $0x2c] sm:$0xf]
    %v591 = vld [vmem:[#allocation7 + $0x30] sm:$0xf]
    %v592 = vld [vmem:[#allocation7 + $0x34] sm:$0xf]
    %v593 = vld [vmem:[#allocation7 + $0x38] sm:$0xf]
    %v594 = vld [vmem:[#allocation7 + $0x3c] sm:$0xf]
    %v595 = vld [vmem:[%s4] sm:$0x1]
    %v597 = vperm.slane %v595, 0
    %v615 = vunpack.c.l.b16 %v579
    %v616 = vunpack.c.l.b16 %v580
    %v617 = vunpack.c.l.b16 %v581
    %v618 = vunpack.c.l.b16 %v582
    %v619 = vunpack.c.l.b16 %v583
    %v620 = vunpack.c.l.b16 %v584
    %v621 = vunpack.c.l.b16 %v585
    %v622 = vunpack.c.l.b16 %v586
    %v623 = vunpack.c.l.b16 %v587
    %v624 = vunpack.c.l.b16 %v588
    %v625 = vunpack.c.l.b16 %v589
    %v626 = vunpack.c.l.b16 %v590
    %v627 = vunpack.c.l.b16 %v591
    %v628 = vunpack.c.l.b16 %v592
    %v629 = vunpack.c.l.b16 %v593
    %v630 = vunpack.c.l.b16 %v594
    %v631 = vpack.c.b16 %v616, %v615
    %v632 = vpack.c.b16 %v618, %v617
    %v633 = vpack.c.b16 %v620, %v619
    %v634 = vpack.c.b16 %v622, %v621
    %v635 = vpack.c.b16 %v624, %v623
    %v636 = vpack.c.b16 %v626, %v625
    %v637 = vpack.c.b16 %v628, %v627
    %v638 = vpack.c.b16 %v630, %v629
    %647 = vmatpush.bf16.msra.mxu0 %v638
    %648 = vmatpush.bf16.msra.mxu0 %v637
    %649 = vmatpush.bf16.msra.mxu0 %v636
    %650 = vmatpush.bf16.msra.mxu0 %v635
    %651 = vmatpush.bf16.msra.mxu0 %v634
    %652 = vmatpush.bf16.msra.mxu0 %v633
    %653 = vmatpush.bf16.msra.mxu0 %v632
    %654 = vmatpush.bf16.msra.mxu0 %v631
    %655 = vmatmul.bf16.gmra.mxu0 %v578
    %v656 = vpop.f32.mrf.mxu0
    %v657 = vadd.f32 %v597, %v656
    %v658 = vpop.f32.mrf.mxu0
    %v659 = vadd.f32 %v597, %v658
    %660 = vdwg.mxu0
    %661 = vst [vmem:[#allocation8] sm:$0xff] %v657
    %662 = vst [vmem:[#allocation8 + $0x8] sm:$0xff] %v659
    // Predicated region
    $region34: #{tpu_custom_call.1} parent=1 // pred_check
      _
    $region35: #{tpu_custom_call.1} parent=1 // pred_check_branch
      %664 = sbr.rel (0) target = $region37
    $region36: #{tpu_custom_call.1} parent=1 // pred_region
      %666 = vsyncadd [#allocation4], 0
      %s667 = sshll.u32 [#allocation8], 4
      %s668 = int_to_ptr.vmem [resolvable:$true] %s667
      %s669 = sshll.u32 %s5, 4
      %s670 = int_to_ptr.hbm [resolvable:$true] %s669
      %675 = dma.vmem_to_hbm [thread:$0]  %s668, 256, %s670, [#allocation4], 128, 128, 8
    $region37: #{tpu_custom_call.1} parent=1 // pred_fallthru
      _
    // Predicated region
    $region38: #{tpu_custom_call.1} parent=1 // pred_check
      _
    $region39: #{tpu_custom_call.1} parent=1 // pred_check_branch
      %677 = sbr.rel (0) target = $region41
    $region40: #{tpu_custom_call.1} parent=1 // pred_region
      %679 = dma.done [#allocation4], 256
    $region41: #{tpu_custom_call.1} parent=1 // pred_fallthru
      _
    %680 = vsyncpa [#allocation3], 1
    %681 = vsyncpa [#allocation6], 1
    %682 = vsyncpa [#allocation4], 1

</llo_original>
